<compile_context>
chip_gen: v7x
topology: tpu7x:2x2x1
jax: 0.10.0
libtpu: 0.0.40
codegen_flags: <defaults>
</compile_context>

<pallas_src>
import functools

import jax
import jax.numpy as jnp
from jax import lax
from jax.experimental import pallas as pl
from jax.experimental.pallas import tpu as pltpu

_NEG = -1e30  # "minus infinity" for masked maxes; relu(margin + _NEG - d) == 0


def _hardest_ranking_kernel(img_ref, cap_ref, out_ref,
                            imgn_s, rowmax_s, diagc_s, colmax_s, diagr_s,
                            *, margin, inv_n, mm_dtype):
    i = pl.program_id(0)           # row block of the similarity matrix
    j = pl.program_id(1)           # col block (inner / reduction axis)
    ni = pl.num_programs(0)
    nj = pl.num_programs(1)

    # ---- one-time init of the grid-resident accumulators --------------------
    @pl.when((i == 0) & (j == 0))
    def _init():
        out_ref[...] = jnp.zeros(out_ref.shape, jnp.float32)
        colmax_s[...] = jnp.full(colmax_s.shape, _NEG, jnp.float32)
        diagr_s[...] = jnp.zeros(diagr_s.shape, jnp.float32)

    # ---- per row block: normalize images once, reset running row max --------
    @pl.when(j == 0)
    def _row_block_init():
        im = img_ref[...].astype(jnp.float32)
        imgn_s[...] = im * lax.rsqrt(
            jnp.sum(im * im, axis=1, keepdims=True) + 1e-12)
        rowmax_s[...] = jnp.full(rowmax_s.shape, _NEG, jnp.float32)

    imgs = imgn_s[...]                                     # cached, normalized
    caps = cap_ref[...].astype(jnp.float32)
    caps = caps * lax.rsqrt(jnp.sum(caps * caps, axis=1, keepdims=True) + 1e-12)

    # ---- similarity tile on the MXU: (TM, D) x (TN, D)^T -> (TM, TN) ---------
    sim = lax.dot_general(
        imgs.astype(mm_dtype), caps.astype(mm_dtype),
        dimension_numbers=(((1,), (1,)), ((), ())),
        preferred_element_type=jnp.float32)
    tm, tn = sim.shape

    # Global diagonal mask for this tile.
    row_g = i * tm + lax.broadcasted_iota(jnp.int32, (tm, tn), 0)
    col_g = j * tn + lax.broadcasted_iota(jnp.int32, (tm, tn), 1)
    diag_mask = row_g == col_g
    sim_m = jnp.where(diag_mask, _NEG, sim)      # exclude the positive pair

    # Online hardest-negative maxes for this tile.
    rowmax_tile = jnp.max(sim_m, axis=1, keepdims=True)    # (TM, 1)
    colmax_tile = jnp.max(sim_m, axis=0, keepdims=True)    # (1, TN)

    rowmax_s[...] = jnp.maximum(rowmax_s[...], rowmax_tile)
    colmax_s[j] = jnp.maximum(colmax_s[j], colmax_tile)

    # Positive-pair (diagonal) scores: only diagonal tiles contain them.
    @pl.when(i == j)
    def _diag():
        # Sublane-oriented diag: plain row-wise dot of normalized inputs (VPU).
        diagc_s[...] = jnp.sum(imgs * caps, axis=1, keepdims=True)       # (TM, 1)
        # Lane-oriented diag for the caption direction (cheap: N/T tiles only).
        diagr_s[j] = jnp.sum(jnp.where(diag_mask, sim, 0.0),
                             axis=0, keepdims=True)                      # (1, TN)

    # Image -> caption contribution of this row block (row max now complete).
    @pl.when(j == nj - 1)
    def _img_done():
        img_cost = jnp.maximum(margin + rowmax_s[...] - diagc_s[...], 0.0)
        out_ref[...] = out_ref[...] + jnp.sum(img_cost)

    # Final grid point: caption -> image direction and the mean.
    @pl.when((i == ni - 1) & (j == nj - 1))
    def _finalize():
        cap_cost = jnp.maximum(margin + colmax_s[...] - diagr_s[...], 0.0)
        out_ref[...] = (out_ref[...] + jnp.sum(cap_cost)) * inv_n


def _pick_tile(n):
    # 256-wide tiles fill the v6e/v7x MXU; 128 matches v5e; otherwise fall back
    # to a single full-size block (still valid per the "equal full dim" rule).
    for t in (256, 128):
        if n % t == 0:
            return t
    return n


def hardest_ranking_loss(images, captions, margin=1.0):
    assert images.shape == captions.shape
    assert images.ndim == 2
    n, d = images.shape
    tile = _pick_tile(n)
    nblk = n // tile

    mm_dtype = jnp.bfloat16 if images.dtype == jnp.bfloat16 else jnp.float32

    kernel = functools.partial(
        _hardest_ranking_kernel,
        margin=float(margin), inv_n=1.0 / float(n), mm_dtype=mm_dtype)

    # Rough VMEM budget: double-buffered input blocks + sim tile / temporaries
    # + scratches (incl. the cached normalized image block), with 2x slack.
    # Capped well under v7x's 64 MiB physical VMEM.
    itemsize = jnp.dtype(images.dtype).itemsize
    est = (2 * 2 * tile * d * itemsize      # double-buffered input blocks
           + tile * d * 4                   # cached normalized image block
           + 8 * tile * tile * 4            # sim tile + temporaries
           + 2 * nblk * 8 * tile * 4        # colmax / lane-diag scratches
           + 2 * tile * 128 * 4)            # rowmax / sublane-diag scratches
    vmem_limit = int(min(56 * 2**20, max(32 * 2**20, 2 * est)))

    out = pl.pallas_call(
        kernel,
        out_shape=jax.ShapeDtypeStruct((1, 1), jnp.float32),
        grid=(nblk, nblk),
        in_specs=[
            pl.BlockSpec((tile, d), lambda i, j: (i, 0)),   # image row block
            pl.BlockSpec((tile, d), lambda i, j: (j, 0)),   # caption row block
        ],
        out_specs=pl.BlockSpec((1, 1), lambda i, j: (0, 0)),
        scratch_shapes=[
            pltpu.VMEM((tile, d), jnp.float32),         # cached normalized imgs
            pltpu.VMEM((tile, 1), jnp.float32),         # running row max
            pltpu.VMEM((tile, 1), jnp.float32),         # diag, sublane-oriented
            pltpu.VMEM((nblk, 1, tile), jnp.float32),   # running col max (all cols)
            pltpu.VMEM((nblk, 1, tile), jnp.float32),   # diag, lane-oriented
        ],
        compiler_params=pltpu.CompilerParams(
            # Both axes carry state (col-max / loss accumulators across row
            # blocks), so they must stay "arbitrary" (no megacore split here).
            dimension_semantics=("arbitrary", "arbitrary"),
            vmem_limit_bytes=vmem_limit,
        ),
    )(images, captions)
    return out[0, 0]


def _reference_loss(images, captions, margin=1.0):
    images = images / jnp.linalg.norm(images, axis=1, keepdims=True)
    captions = captions / jnp.linalg.norm(captions, axis=1, keepdims=True)
    n = images.shape[0]
    sim = jnp.matmul(images, captions.T, precision=jax.lax.Precision.HIGHEST)
    diag = jnp.diag(sim).reshape(n, 1)
    eye = jnp.eye(n, dtype=bool)

    ci = margin + sim - diag
    ci = jnp.where(eye, 0.0, ci)
    ci = jnp.mean(jnp.max(jnp.maximum(ci, 0.0), axis=1))

    cc = margin + sim.T - diag
    cc = jnp.where(eye, 0.0, cc)
    cc = jnp.mean(jnp.max(jnp.maximum(cc, 0.0), axis=1))
    return ci + cc


if __name__ == "__main__":
    key = jax.random.PRNGKey(0)
    k1, k2, k3, k4 = jax.random.split(key, 4)

    # Small shapes consistent with the module: batch N = 8, embed dim D = 32.
    images = jax.random.normal(k1, (8, 32), dtype=jnp.float32)
    captions = jax.random.normal(k2, (8, 32), dtype=jnp.float32)
    loss = jax.block_until_ready(hardest_ranking_loss(images, captions, margin=1.0))
    ref = _reference_loss(images, captions, margin=1.0)
    assert jnp.allclose(loss, ref, atol=2e-3, rtol=2e-3), (loss, ref)

    # Exercise the multi-tile path: N = 384 -> 128-row tiles, grid = (3, 3).
    images2 = jax.random.normal(k3, (384, 64), dtype=jnp.float32)
    captions2 = jax.random.normal(k4, (384, 64), dtype=jnp.float32)
    loss2 = jax.block_until_ready(hardest_ranking_loss(images2, captions2, margin=1.0))
    ref2 = _reference_loss(images2, captions2, margin=1.0)
    assert jnp.allclose(loss2, ref2, atol=2e-3, rtol=2e-3), (loss2, ref2)

    print("KERNEL_OK")
</pallas_src>

<mosaic_0001>
module attributes {stable_mosaic.version = 11 : i64} {
  func.func @_hardest_ranking_kernel(%arg0: i32, %arg1: i32, %arg2: memref<8x32xf32, #tpu.memory_space<vmem>>, %arg3: memref<8x32xf32, #tpu.memory_space<vmem>>, %arg4: memref<1x1xf32, #tpu.memory_space<vmem>>, %arg5: memref<8x32xf32, #tpu.memory_space<vmem>>, %arg6: memref<8x1xf32, #tpu.memory_space<vmem>>, %arg7: memref<8x1xf32, #tpu.memory_space<vmem>>, %arg8: memref<1x1x8xf32, #tpu.memory_space<vmem>>, %arg9: memref<1x1x8xf32, #tpu.memory_space<vmem>>) attributes {dimension_semantics = [#tpu.dimension_semantics<arbitrary>, #tpu.dimension_semantics<arbitrary>], iteration_bounds = array<i64: 1, 1>, scalar_prefetch = 0 : i64, scratch_operands = 5 : i64, tpu.core_type = #tpu.core_type<tc>, window_params = [{transform_indices = @transform_0, window_bounds = array<i64: 8, 32>}, {transform_indices = @transform_1, window_bounds = array<i64: 8, 32>}, {pipeline_mode = #tpu.pipeline_mode<synchronous>, transform_indices = @transform_2, window_bounds = array<i64: 1, 1>}]} {
    %c0_i32 = arith.constant 0 : i32
    %0 = arith.cmpi eq, %arg0, %c0_i32 : i32
    %c0_i32_0 = arith.constant 0 : i32
    %1 = arith.cmpi eq, %arg1, %c0_i32_0 : i32
    %2 = arith.andi %0, %1 : i1
    %3 = arith.extui %2 : i1 to i32
    %c0_i32_1 = arith.constant 0 : i32
    %4 = arith.cmpi ne, %3, %c0_i32_1 : i32
    scf.if %4 {
      %cst_27 = arith.constant 0.000000e+00 : f32
      %56 = vector.broadcast %cst_27 : f32 to vector<1x1xf32>
      %c0_28 = arith.constant 0 : index
      %c0_29 = arith.constant 0 : index
      %57 = vector.load %arg4[%c0_28, %c0_29] : memref<1x1xf32, #tpu.memory_space<vmem>>, vector<1x1xf32>
      tpu.vector_store %arg4[%c0_28, %c0_29], %56 {strides = array<i32>} : memref<1x1xf32, #tpu.memory_space<vmem>>, vector<1x1xf32>,
      %cst_30 = arith.constant -1.000000e+30 : f32
      %58 = vector.broadcast %cst_30 : f32 to vector<1x1x8xf32>
      %c0_31 = arith.constant 0 : index
      %c0_32 = arith.constant 0 : index
      %c0_33 = arith.constant 0 : index
      %59 = vector.load %arg8[%c0_31, %c0_32, %c0_33] : memref<1x1x8xf32, #tpu.memory_space<vmem>>, vector<1x1x8xf32>
      tpu.vector_store %arg8[%c0_31, %c0_32, %c0_33], %58 {strides = array<i32>} : memref<1x1x8xf32, #tpu.memory_space<vmem>>, vector<1x1x8xf32>,
      %cst_34 = arith.constant 0.000000e+00 : f32
      %60 = vector.broadcast %cst_34 : f32 to vector<1x1x8xf32>
      %c0_35 = arith.constant 0 : index
      %c0_36 = arith.constant 0 : index
      %c0_37 = arith.constant 0 : index
      %61 = vector.load %arg9[%c0_35, %c0_36, %c0_37] : memref<1x1x8xf32, #tpu.memory_space<vmem>>, vector<1x1x8xf32>
      tpu.vector_store %arg9[%c0_35, %c0_36, %c0_37], %60 {strides = array<i32>} : memref<1x1x8xf32, #tpu.memory_space<vmem>>, vector<1x1x8xf32>,
    } else {
    }
    %c0_i32_2 = arith.constant 0 : i32
    %5 = arith.cmpi eq, %arg1, %c0_i32_2 : i32
    %6 = arith.extui %5 : i1 to i32
    %c0_i32_3 = arith.constant 0 : i32
    %7 = arith.cmpi ne, %6, %c0_i32_3 : i32
    scf.if %7 {
      %c0_27 = arith.constant 0 : index
      %c0_28 = arith.constant 0 : index
      %56 = vector.load %arg2[%c0_27, %c0_28] : memref<8x32xf32, #tpu.memory_space<vmem>>, vector<8x32xf32>
      %57 = arith.mulf %56, %56 : vector<8x32xf32>
      %cst_29 = arith.constant dense<0.000000e+00> : vector<8xf32>
      %58 = vector.multi_reduction <add>, %57, %cst_29 [1] : vector<8x32xf32> to vector<8xf32>
      %59 = vector.shape_cast %58 : vector<8xf32> to vector<8x1xf32>
      %cst_30 = arith.constant 9.99999996E-13 : f32
      %60 = vector.broadcast %cst_30 : f32 to vector<8x1xf32>
      %61 = arith.addf %59, %60 : vector<8x1xf32>
      %62 = math.rsqrt %61 : vector<8x1xf32>
      %63 = vector.broadcast %62 : vector<8x1xf32> to vector<8x32xf32>
      %64 = arith.mulf %56, %63 : vector<8x32xf32>
      %c0_31 = arith.constant 0 : index
      %c0_32 = arith.constant 0 : index
      %65 = vector.load %arg5[%c0_31, %c0_32] : memref<8x32xf32, #tpu.memory_space<vmem>>, vector<8x32xf32>
      tpu.vector_store %arg5[%c0_31, %c0_32], %64 {strides = array<i32>} : memref<8x32xf32, #tpu.memory_space<vmem>>, vector<8x32xf32>,
      %cst_33 = arith.constant -1.000000e+30 : f32
      %66 = vector.broadcast %cst_33 : f32 to vector<8x1xf32>
      %c0_34 = arith.constant 0 : index
      %c0_35 = arith.constant 0 : index
      %67 = vector.load %arg6[%c0_34, %c0_35] : memref<8x1xf32, #tpu.memory_space<vmem>>, vector<8x1xf32>
      tpu.vector_store %arg6[%c0_34, %c0_35], %66 {strides = array<i32>} : memref<8x1xf32, #tpu.memory_space<vmem>>, vector<8x1xf32>,
    } else {
    }
    %c0 = arith.constant 0 : index
    %c0_4 = arith.constant 0 : index
    %8 = vector.load %arg5[%c0, %c0_4] : memref<8x32xf32, #tpu.memory_space<vmem>>, vector<8x32xf32>
    %c0_5 = arith.constant 0 : index
    %c0_6 = arith.constant 0 : index
    %9 = vector.load %arg3[%c0_5, %c0_6] : memref<8x32xf32, #tpu.memory_space<vmem>>, vector<8x32xf32>
    %10 = arith.mulf %9, %9 : vector<8x32xf32>
    %cst = arith.constant dense<0.000000e+00> : vector<8xf32>
    %11 = vector.multi_reduction <add>, %10, %cst [1] : vector<8x32xf32> to vector<8xf32>
    %12 = vector.shape_cast %11 : vector<8xf32> to vector<8x1xf32>
    %cst_7 = arith.constant 9.99999996E-13 : f32
    %13 = vector.broadcast %cst_7 : f32 to vector<8x1xf32>
    %14 = arith.addf %12, %13 : vector<8x1xf32>
    %15 = math.rsqrt %14 : vector<8x1xf32>
    %16 = vector.broadcast %15 : vector<8x1xf32> to vector<8x32xf32>
    %17 = arith.mulf %9, %16 : vector<8x32xf32>
    %cst_8 = arith.constant dense<0.000000e+00> : vector<8x8xf32>
    %18 = tpu.matmul %8, %17, %cst_8 {dimension_numbers = #tpu.dot_dimension_numbers<[1], [1], [0], [0], [0, 0, 1, 0], [], []>} : vector<8x32xf32>, vector<8x32xf32>, vector<8x8xf32> -> vector<8x8xf32>
    %c8_i32 = arith.constant 8 : i32
    %19 = arith.muli %arg0, %c8_i32 : i32
    %20 = tpu.iota {dimensions = array<i32: 0>} : vector<8x8xi32>
    %21 = vector.broadcast %19 : i32 to vector<8x8xi32>
    %22 = arith.addi %21, %20 : vector<8x8xi32>
    %c8_i32_9 = arith.constant 8 : i32
    %23 = arith.muli %arg1, %c8_i32_9 : i32
    %24 = tpu.iota {dimensions = array<i32: 1>} : vector<8x8xi32>
    %25 = vector.broadcast %23 : i32 to vector<8x8xi32>
    %26 = arith.addi %25, %24 : vector<8x8xi32>
    %27 = arith.cmpi eq, %22, %26 : vector<8x8xi32>
    %cst_10 = arith.constant -1.000000e+30 : f32
    %28 = vector.broadcast %cst_10 : f32 to vector<8x8xf32>
    %29 = arith.select %27, %28, %18 : vector<8x8xi1>, vector<8x8xf32>
    %cst_11 = arith.constant dense<0xFF800000> : vector<8xf32>
    %30 = vector.multi_reduction <maximumf>, %29, %cst_11 [1] : vector<8x8xf32> to vector<8xf32>
    %31 = vector.shape_cast %30 : vector<8xf32> to vector<8x1xf32>
    %cst_12 = arith.constant dense<0xFF800000> : vector<8xf32>
    %32 = vector.multi_reduction <maximumf>, %29, %cst_12 [0] : vector<8x8xf32> to vector<8xf32>
    %33 = vector.shape_cast %32 : vector<8xf32> to vector<1x8xf32>
    %c0_13 = arith.constant 0 : index
    %c0_14 = arith.constant 0 : index
    %34 = vector.load %arg6[%c0_13, %c0_14] : memref<8x1xf32, #tpu.memory_space<vmem>>, vector<8x1xf32>
    %35 = arith.maximumf %34, %31 : vector<8x1xf32>
    %c0_15 = arith.constant 0 : index
    %c0_16 = arith.constant 0 : index
    %36 = vector.load %arg6[%c0_15, %c0_16] : memref<8x1xf32, #tpu.memory_space<vmem>>, vector<8x1xf32>
    tpu.vector_store %arg6[%c0_15, %c0_16], %35 {strides = array<i32>} : memref<8x1xf32, #tpu.memory_space<vmem>>, vector<8x1xf32>,
    %37 = arith.index_cast %arg1 : i32 to index
    %c0_17 = arith.constant 0 : index
    %c0_18 = arith.constant 0 : index
    %38 = vector.load %arg8[%37, %c0_17, %c0_18] : memref<1x1x8xf32, #tpu.memory_space<vmem>>, vector<1x1x8xf32>
    %39 = vector.shape_cast %38 : vector<1x1x8xf32> to vector<1x8xf32>
    %40 = arith.maximumf %39, %33 : vector<1x8xf32>
    %41 = arith.index_cast %arg1 : i32 to index
    %c0_19 = arith.constant 0 : index
    %c0_20 = arith.constant 0 : index
    %42 = vector.load %arg8[%41, %c0_19, %c0_20] : memref<1x1x8xf32, #tpu.memory_space<vmem>>, vector<1x1x8xf32>
    %43 = vector.shape_cast %42 : vector<1x1x8xf32> to vector<1x8xf32>
    %44 = vector.shape_cast %40 : vector<1x8xf32> to vector<1x1x8xf32>
    tpu.vector_store %arg8[%41, %c0_19, %c0_20], %44 {strides = array<i32>} : memref<1x1x8xf32, #tpu.memory_space<vmem>>, vector<1x1x8xf32>,
    %45 = arith.cmpi eq, %arg0, %arg1 : i32
    %46 = arith.extui %45 : i1 to i32
    %c0_i32_21 = arith.constant 0 : i32
    %47 = arith.cmpi ne, %46, %c0_i32_21 : i32
    scf.if %47 {
      %56 = arith.mulf %8, %17 : vector<8x32xf32>
      %cst_27 = arith.constant dense<0.000000e+00> : vector<8xf32>
      %57 = vector.multi_reduction <add>, %56, %cst_27 [1] : vector<8x32xf32> to vector<8xf32>
      %58 = vector.shape_cast %57 : vector<8xf32> to vector<8x1xf32>
      %c0_28 = arith.constant 0 : index
      %c0_29 = arith.constant 0 : index
      %59 = vector.load %arg7[%c0_28, %c0_29] : memref<8x1xf32, #tpu.memory_space<vmem>>, vector<8x1xf32>
      tpu.vector_store %arg7[%c0_28, %c0_29], %58 {strides = array<i32>} : memref<8x1xf32, #tpu.memory_space<vmem>>, vector<8x1xf32>,
      %cst_30 = arith.constant 0.000000e+00 : f32
      %60 = vector.broadcast %cst_30 : f32 to vector<8x8xf32>
      %61 = arith.select %27, %18, %60 : vector<8x8xi1>, vector<8x8xf32>
      %cst_31 = arith.constant dense<0.000000e+00> : vector<8xf32>
      %62 = vector.multi_reduction <add>, %61, %cst_31 [0] : vector<8x8xf32> to vector<8xf32>
      %63 = vector.shape_cast %62 : vector<8xf32> to vector<1x8xf32>
      %64 = arith.index_cast %arg1 : i32 to index
      %c0_32 = arith.constant 0 : index
      %c0_33 = arith.constant 0 : index
      %65 = vector.load %arg9[%64, %c0_32, %c0_33] : memref<1x1x8xf32, #tpu.memory_space<vmem>>, vector<1x1x8xf32>
      %66 = vector.shape_cast %65 : vector<1x1x8xf32> to vector<1x8xf32>
      %67 = vector.shape_cast %63 : vector<1x8xf32> to vector<1x1x8xf32>
      tpu.vector_store %arg9[%64, %c0_32, %c0_33], %67 {strides = array<i32>} : memref<1x1x8xf32, #tpu.memory_space<vmem>>, vector<1x1x8xf32>,
    } else {
    }
    %c0_i32_22 = arith.constant 0 : i32
    %48 = arith.cmpi eq, %arg1, %c0_i32_22 : i32
    %49 = arith.extui %48 : i1 to i32
    %c0_i32_23 = arith.constant 0 : i32
    %50 = arith.cmpi ne, %49, %c0_i32_23 : i32
    scf.if %50 {
      %c0_27 = arith.constant 0 : index
      %c0_28 = arith.constant 0 : index
      %56 = vector.load %arg6[%c0_27, %c0_28] : memref<8x1xf32, #tpu.memory_space<vmem>>, vector<8x1xf32>
      %cst_29 = arith.constant 1.000000e+00 : f32
      %57 = vector.broadcast %cst_29 : f32 to vector<8x1xf32>
      %58 = arith.addf %57, %56 : vector<8x1xf32>
      %c0_30 = arith.constant 0 : index
      %c0_31 = arith.constant 0 : index
      %59 = vector.load %arg7[%c0_30, %c0_31] : memref<8x1xf32, #tpu.memory_space<vmem>>, vector<8x1xf32>
      %60 = arith.subf %58, %59 : vector<8x1xf32>
      %cst_32 = arith.constant 0.000000e+00 : f32
      %61 = vector.broadcast %cst_32 : f32 to vector<8x1xf32>
      %62 = arith.maximumf %60, %61 : vector<8x1xf32>
      %c0_33 = arith.constant 0 : index
      %c0_34 = arith.constant 0 : index
      %63 = vector.load %arg4[%c0_33, %c0_34] : memref<1x1xf32, #tpu.memory_space<vmem>>, vector<1x1xf32>
      %64 = vector.shape_cast %62 : vector<8x1xf32> to vector<1x8x1xf32>
      %cst_35 = arith.constant dense<0.000000e+00> : vector<1xf32>
      %65 = vector.multi_reduction <add>, %64, %cst_35 [1, 2] : vector<1x8x1xf32> to vector<1xf32>
      %66 = vector.shape_cast %65 : vector<1xf32> to vector<1x1x1xf32>
      %67 = vector.extract %66[0, 0, 0] : f32 from vector<1x1x1xf32>
      %68 = vector.broadcast %67 : f32 to vector<1x1xf32>
      %69 = arith.addf %63, %68 : vector<1x1xf32>
      %c0_36 = arith.constant 0 : index
      %c0_37 = arith.constant 0 : index
      %70 = vector.load %arg4[%c0_36, %c0_37] : memref<1x1xf32, #tpu.memory_space<vmem>>, vector<1x1xf32>
      tpu.vector_store %arg4[%c0_36, %c0_37], %69 {strides = array<i32>} : memref<1x1xf32, #tpu.memory_space<vmem>>, vector<1x1xf32>,
    } else {
    }
    %c0_i32_24 = arith.constant 0 : i32
    %51 = arith.cmpi eq, %arg0, %c0_i32_24 : i32
    %c0_i32_25 = arith.constant 0 : i32
    %52 = arith.cmpi eq, %arg1, %c0_i32_25 : i32
    %53 = arith.andi %51, %52 : i1
    %54 = arith.extui %53 : i1 to i32
    %c0_i32_26 = arith.constant 0 : i32
    %55 = arith.cmpi ne, %54, %c0_i32_26 : i32
    scf.if %55 {
      %c0_27 = arith.constant 0 : index
      %c0_28 = arith.constant 0 : index
      %c0_29 = arith.constant 0 : index
      %56 = vector.load %arg8[%c0_27, %c0_28, %c0_29] : memref<1x1x8xf32, #tpu.memory_space<vmem>>, vector<1x1x8xf32>
      %cst_30 = arith.constant 1.000000e+00 : f32
      %57 = vector.broadcast %cst_30 : f32 to vector<1x1x8xf32>
      %58 = arith.addf %57, %56 : vector<1x1x8xf32>
      %c0_31 = arith.constant 0 : index
      %c0_32 = arith.constant 0 : index
      %c0_33 = arith.constant 0 : index
      %59 = vector.load %arg9[%c0_31, %c0_32, %c0_33] : memref<1x1x8xf32, #tpu.memory_space<vmem>>, vector<1x1x8xf32>
      %60 = arith.subf %58, %59 : vector<1x1x8xf32>
      %cst_34 = arith.constant 0.000000e+00 : f32
      %61 = vector.broadcast %cst_34 : f32 to vector<1x1x8xf32>
      %62 = arith.maximumf %60, %61 : vector<1x1x8xf32>
      %c0_35 = arith.constant 0 : index
      %c0_36 = arith.constant 0 : index
      %63 = vector.load %arg4[%c0_35, %c0_36] : memref<1x1xf32, #tpu.memory_space<vmem>>, vector<1x1xf32>
      %64 = vector.shape_cast %62 : vector<1x1x8xf32> to vector<1x1x1x8xf32>
      %cst_37 = arith.constant dense<0.000000e+00> : vector<1xf32>
      %65 = vector.multi_reduction <add>, %64, %cst_37 [1, 2, 3] : vector<1x1x1x8xf32> to vector<1xf32>
      %66 = vector.shape_cast %65 : vector<1xf32> to vector<1x1x1x1xf32>
      %67 = vector.extract %66[0, 0, 0, 0] : f32 from vector<1x1x1x1xf32>
      %68 = vector.broadcast %67 : f32 to vector<1x1xf32>
      %69 = arith.addf %63, %68 : vector<1x1xf32>
      %cst_38 = arith.constant 1.250000e-01 : f32
      %70 = vector.broadcast %cst_38 : f32 to vector<1x1xf32>
      %71 = arith.mulf %69, %70 : vector<1x1xf32>
      %c0_39 = arith.constant 0 : index
      %c0_40 = arith.constant 0 : index
      %72 = vector.load %arg4[%c0_39, %c0_40] : memref<1x1xf32, #tpu.memory_space<vmem>>, vector<1x1xf32>
      tpu.vector_store %arg4[%c0_39, %c0_40], %71 {strides = array<i32>} : memref<1x1xf32, #tpu.memory_space<vmem>>, vector<1x1xf32>,
    } else {
    }
    return
  }
  func.func @transform_0(%arg0: i32, %arg1: i32) -> (i32, i32) {
    %c0_i32 = arith.constant 0 : i32
    %c0_i32_0 = arith.constant 0 : i32
    return %arg0, %c0_i32 : i32, i32
  }
  func.func @transform_1(%arg0: i32, %arg1: i32) -> (i32, i32) {
    %c0_i32 = arith.constant 0 : i32
    %c0_i32_0 = arith.constant 0 : i32
    return %arg1, %c0_i32 : i32, i32
  }
  func.func @transform_2(%arg0: i32, %arg1: i32) -> (i32, i32) {
    %c0_i32 = arith.constant 0 : i32
    %c0_i32_0 = arith.constant 0 : i32
    %c0_i32_1 = arith.constant 0 : i32
    return %c0_i32, %c0_i32_0 : i32, i32
  }
}

</mosaic_0001>

<llo_original>
// kernel: tpu_custom_call.1
$region0: #{tpu_custom_call.1}
  #allocation0 [shape = 'u32[]', space=smem, size = 0x4, offset = 0x4, fixed_abs, tag = 'smem constant byte address 0x4 - core index']
  #allocation1 [shape = 'u32[144,128]{1,0:T(1,128)}', space=vmem, size = 0x12000, scoped, tag = 'internal scratch']
  #allocation2 [shape = 'f32[8,32]{1,0:T(8,128)}', space=vmem, size = 0x1000, scoped, tag = 'scratch operand']
  #allocation3 [shape = 'f32[8,1]{1,0:T(8,128)}', space=vmem, size = 0x1000, scoped, tag = 'scratch operand']
  #allocation4 [shape = 'f32[8,1]{1,0:T(8,128)}', space=vmem, size = 0x1000, scoped, tag = 'scratch operand']
  #allocation5 [shape = 'f32[1,1,8]{2,1,0:T(1,128)}', space=vmem, size = 0x200, scoped, tag = 'scratch operand']
  #allocation6 [shape = 'f32[1,1,8]{2,1,0:T(1,128)}', space=vmem, size = 0x200, scoped, tag = 'scratch operand']
  %s0 = inlined_call_operand.hbm [shape: f32[8,32], index: 0, kind: input, shape index: {}]
  %s1 = inlined_call_operand.hbm [shape: f32[8,32], index: 1, kind: input, shape index: {}]
  %s2 = inlined_call_operand.hbm [shape: f32[1,1], index: 2, kind: output, shape index: {}]
  %s3 = sld [smem:[#allocation0]]
  $region46: #{tpu_custom_call.1} parent=0
    _
  %s5 = ssub.s32 1, %s3
  %s6 = scalar_select 0, %s5, %s3
  $region1: #{tpu_custom_call.1} parent=0
    #allocation7 [shape = 'u8[4096]{0}', space=vmem, size = 0x1000, scoped, tag = 'input window, operand 0, single buffered']
    #allocation8 [shape = 's32[1]{0}', space=sflag, size = 0x4, scoped, tag = 'scoped memory for tpu_custom_call.1']
    #allocation9 [shape = 's32[1]{0}', space=sflag, size = 0x4, scoped, tag = 'scoped memory for tpu_custom_call.1']
    #allocation10 [shape = 'u8[4096]{0}', space=vmem, size = 0x1000, scoped, tag = 'input window, operand 1, single buffered']
    #allocation11 [shape = 's32[1]{0}', space=sflag, size = 0x4, scoped, tag = 'scoped memory for tpu_custom_call.1']
    #allocation12 [shape = 'u8[512]{0}', space=vmem, size = 0x400, scoped, tag = 'output window, operand 0, single buffered']
    %7 = vsyncpa [#allocation8], 0
    %8 = vsyncpa [#allocation11], 0
    %9 = vsyncpa [#allocation9], 0
    // Predicated region
    $region2: #{tpu_custom_call.1} parent=1 // pred_check
      _
    $region3: #{tpu_custom_call.1} parent=1 // pred_check_branch
      %11 = sbr.rel (0) target = $region5
    $region4: #{tpu_custom_call.1} parent=1 // pred_region
      %s13 = ssub.s32 128, 128
      %14 = vsyncadd [#allocation8], %s13
      %s16 = sshll.u32 [#allocation7], 4
      %s17 = int_to_ptr.vmem [resolvable:$true] %s16
      %19 = dma.hbm_to_vmem [thread:$0]  %s0, 128, %s17, [#allocation8]
    $region5: #{tpu_custom_call.1} parent=1 // pred_fallthru
      _
    // Predicated region
    $region6: #{tpu_custom_call.1} parent=1 // pred_check
      _
    $region7: #{tpu_custom_call.1} parent=1 // pred_check_branch
      %21 = sbr.rel (0) target = $region9
    $region8: #{tpu_custom_call.1} parent=1 // pred_region
      %s23 = ssub.s32 128, 128
      %24 = vsyncadd [#allocation11], %s23
      %s26 = sshll.u32 [#allocation10], 4
      %s27 = int_to_ptr.vmem [resolvable:$true] %s26
      %29 = dma.hbm_to_vmem [thread:$0]  %s1, 128, %s27, [#allocation11]
    $region9: #{tpu_custom_call.1} parent=1 // pred_fallthru
      _
    // Predicated region
    $region10: #{tpu_custom_call.1} parent=1 // pred_check
      _
    $region11: #{tpu_custom_call.1} parent=1 // pred_check_branch
      %31 = sbr.rel (0) target = $region13
    $region12: #{tpu_custom_call.1} parent=1 // pred_region
      %32 = dma.done [#allocation8], 128
    $region13: #{tpu_custom_call.1} parent=1 // pred_fallthru
      _
    // Predicated region
    $region14: #{tpu_custom_call.1} parent=1 // pred_check
      _
    $region15: #{tpu_custom_call.1} parent=1 // pred_check_branch
      %34 = sbr.rel (0) target = $region17
    $region16: #{tpu_custom_call.1} parent=1 // pred_region
      %35 = dma.done [#allocation11], 128
    $region17: #{tpu_custom_call.1} parent=1 // pred_fallthru
      _
    %p36 = scmp.eq.s32.totalorder 0, 0
    %p37 = scmp.eq.s32.totalorder 0, 0
    %p38 = pnand %p36, %p37
    %p39 = pneg %p38
    // Predicated region
    $region18: #{tpu_custom_call.1} parent=1 // pred_check
      _
    $region19: #{tpu_custom_call.1} parent=1 // pred_check_branch
      %41 = sbr.rel (%p38) target = $region21
    $region20: #{tpu_custom_call.1} parent=1 // pred_region
      %vm42 = vcmask 0
      %43 = vst.msk [vmem:[#allocation12] sm:$0x1] %vm42, 0.0
      %vm44 = vcmask 57344
      %45 = vst.msk [vmem:[#allocation5] sm:$0x1] %vm44, -1e+30
      %46 = vst.msk [vmem:[#allocation6] sm:$0x1] %vm44, 0.0
    $region21: #{tpu_custom_call.1} parent=1 // pred_fallthru
      _
    // Predicated region
    $region22: #{tpu_custom_call.1} parent=1 // pred_check
      %p47 = pneg %p37
    $region23: #{tpu_custom_call.1} parent=1 // pred_check_branch
      %49 = sbr.rel (%p47) target = $region25
    $region24: #{tpu_custom_call.1} parent=1 // pred_region
      %v50 = vld [vmem:[#allocation7] sm:$0xff]
      %v51 = vmul.f32 %v50, %v50
      %vm52 = vcmask 261120
      %v53 = vsel %vm52, %v51, 0.0
      %54 = vadd.xlane.f32.xlu0 %v53
      %v55 = vpop.xlane.xlu0 %54
      %v56 = vadd.f32 %v55, 1e-12
      %v57 = vrsqrt.pop %v56
      %v58 = vmul.f32 %v50, %v57
      %59 = vst.msk [vmem:[#allocation2] sm:$0xff] %vm52, %v58
      %vm60 = vcmask 7168
      %61 = vst.msk [vmem:[#allocation3] sm:$0xff] %vm60, -1e+30
    $region25: #{tpu_custom_call.1} parent=1 // pred_fallthru
      _
    %v62 = vld [vmem:[#allocation2] sm:$0xff]
    %v63 = vld [vmem:[#allocation10] sm:$0xff]
    %v64 = vmul.f32 %v63, %v63
    %vm65 = vcmask 261120
    %v66 = vsel %vm65, %v64, 0.0
    %67 = vadd.xlane.f32.xlu0 %v66
    %v68 = vpop.xlane.xlu0 %67
    %v69 = vadd.f32 %v68, 1e-12
    %v70 = vrsqrt.pop %v69
    %v71 = vmul.f32 %v63, %v70
    %v73 = vsel %vm65, %v62, 0
    %v76 = vsel %vm65, %v71, 0
    %78 = vmatprep.subr.mxu0 0.0
    %79 = vmatpush1.xpose.msra.mxu0 %v76
    %80 = vmatprep.subr.mxu0 0.0
    %81 = vmatpush1.xpose.msra.mxu0 0.0
    %82 = vmatprep.subr.mxu0 0.0
    %83 = vmatpush1.xpose.msra.mxu0 0.0
    %84 = vmatprep.subr.mxu0 0.0
    %85 = vmatpush1.xpose.msra.mxu0 0.0
    %86 = vmatprep.subr.mxu0 0.0
    %87 = vmatpush1.xpose.msra.mxu0 0.0
    %88 = vmatprep.subr.mxu0 0.0
    %89 = vmatpush1.xpose.msra.mxu0 0.0
    %90 = vmatprep.subr.mxu0 0.0
    %91 = vmatpush1.xpose.msra.mxu0 0.0
    %92 = vmatprep.subr.mxu0 0.0
    %93 = vmatpush1.xpose.msra.mxu0 0.0
    %94 = vmatprep.subr.mxu0 0.0
    %95 = vmatpush1.xpose.msra.mxu0 0.0
    %96 = vmatprep.subr.mxu0 0.0
    %97 = vmatpush1.xpose.msra.mxu0 0.0
    %98 = vmatprep.subr.mxu0 0.0
    %99 = vmatpush1.xpose.msra.mxu0 0.0
    %100 = vmatprep.subr.mxu0 0.0
    %101 = vmatpush1.xpose.msra.mxu0 0.0
    %102 = vmatprep.subr.mxu0 0.0
    %103 = vmatpush1.xpose.msra.mxu0 0.0
    %104 = vmatprep.subr.mxu0 0.0
    %105 = vmatpush1.xpose.msra.mxu0 0.0
    %106 = vmatprep.subr.mxu0 0.0
    %107 = vmatpush1.xpose.msra.mxu0 0.0
    %108 = vmatprep.subr.mxu0 0.0
    %109 = vmatpush1.xpose.msra.mxu0 0.0
    %110 = vmatprep.subr.mxu0 0.0
    %111 = vmatpush1.xpose.msra.mxu0 0.0
    %112 = vmatprep.subr.mxu0 0.0
    %113 = vmatpush1.xpose.msra.mxu0 0.0
    %114 = vmatprep.subr.mxu0 0.0
    %115 = vmatpush1.xpose.msra.mxu0 0.0
    %116 = vmatprep.subr.mxu0 0.0
    %117 = vmatpush1.xpose.msra.mxu0 0.0
    %118 = vmatprep.subr.mxu0 0.0
    %119 = vmatpush1.xpose.msra.mxu0 0.0
    %120 = vmatprep.subr.mxu0 0.0
    %121 = vmatpush1.xpose.msra.mxu0 0.0
    %122 = vmatprep.subr.mxu0 0.0
    %123 = vmatpush1.xpose.msra.mxu0 0.0
    %124 = vmatprep.subr.mxu0 0.0
    %125 = vmatpush1.xpose.msra.mxu0 0.0
    %126 = vmatprep.subr.mxu0 0.0
    %127 = vmatpush1.xpose.msra.mxu0 0.0
    %128 = vmatprep.subr.mxu0 0.0
    %129 = vmatpush1.xpose.msra.mxu0 0.0
    %130 = vmatprep.subr.mxu0 0.0
    %131 = vmatpush1.xpose.msra.mxu0 0.0
    %132 = vmatprep.subr.mxu0 0.0
    %133 = vmatpush1.xpose.msra.mxu0 0.0
    %134 = vmatprep.subr.mxu0 0.0
    %135 = vmatpush1.xpose.msra.mxu0 0.0
    %136 = vmatprep.subr.mxu0 0.0
    %137 = vmatpush1.xpose.msra.mxu0 0.0
    %138 = vmatprep.subr.mxu0 0.0
    %139 = vmatpush1.xpose.msra.mxu0 0.0
    %140 = vmatprep.subr.mxu0 0.0
    %141 = vmatpush1.xpose.msra.mxu0 0.0
    %142 = vmatprep.mubr.f32.mxu0 0.0
    %143 = vmatmul.mubr.f32.gmra.mrb[0].mxu0 %v73
    %v144 = vpop.f32.mrb[0].mxu0
    %v145 = vadd.f32 0.0, %v144
    %v146 = vpop.f32.mrb[0].mxu0
    %147 = vdwg.mxu0
    %s148 = smul.u32 0, 8
    %v149 = vlaneseq
    %v150 = vshrl.u32 %v149, 7
    %v151 = vstv %s148
    %v152 = vadd.s32 %v151, %v150
    %s153 = smul.u32 0, 8
    %v154 = vlaneseq
    %v155 = vand.u32 %v154, 127
    %v156 = vstv %s153
    %v157 = vadd.s32 %v156, %v155
    %vm158 = vcmp.eq.s32.totalorder %v152, %v157
    %v159 = vsel %vm158, -1e+30, %v145
    %vm160 = vcmask 64512
    %v161 = vsel %vm160, %v159, -inf
    %162 = vmax.xlane.f32.xlu0 %v161
    %v163 = vpop.xlane.xlu0 %162
    %v164 = vrot.slane %v161, 4
    %v165 = vmax.f32 %v161, %v164
    %v166 = vrot.slane %v165, 2
    %v167 = vmax.f32 %v165, %v166
    %v168 = vrot.slane %v167, 1
    %v169 = vmax.f32 %v167, %v168
    %v170 = vld [vmem:[#allocation3] sm:$0xff]
    %v171 = vmax.f32 %v170, %v163
    %vm172 = vcmask 7168
    %173 = vst.msk [vmem:[#allocation3] sm:$0xff] %vm172, %v171
    %v174 = vld [vmem:[#allocation5] sm:$0x1]
    %v175 = vmax.f32 %v174, %v169
    %vm176 = vcmask 57344
    %177 = vst.msk [vmem:[#allocation5] sm:$0x1] %vm176, %v175
    %p178 = scmp.eq.s32.totalorder 0, 0
    // Predicated region
    $region26: #{tpu_custom_call.1} parent=1 // pred_check
      %p179 = pneg %p178
    $region27: #{tpu_custom_call.1} parent=1 // pred_check_branch
      %181 = sbr.rel (%p179) target = $region29
    $region28: #{tpu_custom_call.1} parent=1 // pred_region
      %v182 = vmul.f32 %v62, %v71
      %v183 = vsel %vm65, %v182, 0.0
      %184 = vadd.xlane.f32.xlu0 %v183
      %v185 = vpop.xlane.xlu0 %184
      %186 = vst.msk [vmem:[#allocation4] sm:$0xff] %vm172, %v185
      %v187 = vsel %vm158, %v145, 0.0
      %v188 = vsel %vm160, %v187, 0.0
      %v189 = vrot.slane %v188, 4
      %v190 = vadd.f32 %v188, %v189
      %v191 = vrot.slane %v190, 2
      %v192 = vadd.f32 %v190, %v191
      %v193 = vrot.slane %v192, 1
      %v194 = vadd.f32 %v192, %v193
      %195 = vst.msk [vmem:[#allocation6] sm:$0x1] %vm176, %v194
    $region29: #{tpu_custom_call.1} parent=1 // pred_fallthru
      _
    // Predicated region
    $region30: #{tpu_custom_call.1} parent=1 // pred_check
      %p196 = pneg %p37
    $region31: #{tpu_custom_call.1} parent=1 // pred_check_branch
      %198 = sbr.rel (%p196) target = $region33
    $region32: #{tpu_custom_call.1} parent=1 // pred_region
      %v199 = vld [vmem:[#allocation3] sm:$0xff]
      %v200 = vadd.f32 %v199, 1.0
      %v201 = vld [vmem:[#allocation4] sm:$0xff]
      %v202 = vsub.f32 %v200, %v201
      %v203 = vmax.f32 %v202, 0.0
      %v204 = vld [vmem:[#allocation12] sm:$0x1]
      %v205 = vsel %vm172, %v203, 0.0
      %206 = vadd.xlane.f32.xlu0 %v205
      %v207 = vpop.xlane.xlu0 %206
      %v208 = vrot.slane %v207, 4
      %v209 = vadd.f32 %v207, %v208
      %v210 = vrot.slane %v209, 2
      %v211 = vadd.f32 %v209, %v210
      %v212 = vrot.slane %v211, 1
      %v213 = vadd.f32 %v211, %v212
      %s214 = vtos %v213
      %v215 = vstv %s214
      %v216 = vadd.f32 %v204, %v215
      %vm217 = vcmask 0
      %218 = vst.msk [vmem:[#allocation12] sm:$0x1] %vm217, %v216
    $region33: #{tpu_custom_call.1} parent=1 // pred_fallthru
      _
    // Predicated region
    $region34: #{tpu_custom_call.1} parent=1 // pred_check
      _
    $region35: #{tpu_custom_call.1} parent=1 // pred_check_branch
      %220 = sbr.rel (%p38) target = $region37
    $region36: #{tpu_custom_call.1} parent=1 // pred_region
      %v221 = vld [vmem:[#allocation5] sm:$0x1]
      %v222 = vadd.f32 %v221, 1.0
      %v223 = vld [vmem:[#allocation6] sm:$0x1]
      %v224 = vsub.f32 %v222, %v223
      %v225 = vmax.f32 %v224, 0.0
      %v226 = vld [vmem:[#allocation12] sm:$0x1]
      %v227 = vsel %vm176, %v225, 0.0
      %228 = vadd.xlane.f32.xlu0 %v227
      %v229 = vpop.xlane.xlu0 %228
      %v230 = vrot.slane %v229, 4
      %v231 = vadd.f32 %v229, %v230
      %v232 = vrot.slane %v231, 2
      %v233 = vadd.f32 %v231, %v232
      %v234 = vrot.slane %v233, 1
      %v235 = vadd.f32 %v233, %v234
      %s236 = vtos %v235
      %v237 = vstv %s236
      %v238 = vadd.f32 %v226, %v237
      %v239 = vmul.f32 %v238, 0.125
      %vm240 = vcmask 0
      %241 = vst.msk [vmem:[#allocation12] sm:$0x1] %vm240, %v239
    $region37: #{tpu_custom_call.1} parent=1 // pred_fallthru
      _
    // Predicated region
    $region38: #{tpu_custom_call.1} parent=1 // pred_check
      _
    $region39: #{tpu_custom_call.1} parent=1 // pred_check_branch
      %243 = sbr.rel (0) target = $region41
    $region40: #{tpu_custom_call.1} parent=1 // pred_region
      %s245 = ssub.s32 16, 16
      %246 = vsyncadd [#allocation9], %s245
      %s248 = sshll.u32 [#allocation12], 4
      %s249 = int_to_ptr.vmem [resolvable:$true] %s248
      %251 = dma.vmem_to_hbm [thread:$0]  %s249, 16, %s2, [#allocation9]
    $region41: #{tpu_custom_call.1} parent=1 // pred_fallthru
      _
    // Predicated region
    $region42: #{tpu_custom_call.1} parent=1 // pred_check
      _
    $region43: #{tpu_custom_call.1} parent=1 // pred_check_branch
      %253 = sbr.rel (0) target = $region45
    $region44: #{tpu_custom_call.1} parent=1 // pred_region
      %254 = dma.done [#allocation9], 16
    $region45: #{tpu_custom_call.1} parent=1 // pred_fallthru
      _
    %255 = vsyncpa [#allocation8], 1
    %256 = vsyncpa [#allocation11], 1
    %257 = vsyncpa [#allocation9], 1

</llo_original>
